<compile_context>
chip_gen: v5e
topology: v5e:2x2
jax: 0.10.0
libtpu: 0.0.40
codegen_flags: <defaults>
</compile_context>

<pallas_src>
import jax
import jax.numpy as jnp
from jax.experimental import pallas as pl
from jax.experimental.pallas import tpu as pltpu


def _round_up(x, m):
    return -(-x // m) * m


# ---------------- Pallas kernel ----------------

def _make_blend_kernel(sigma, gamma, background_color, znear, zfar, total_p, tile):
    eps = 1e-10
    bg_r, bg_g, bg_b = (float(c) for c in background_color)
    neg_inv_sigma = -1.0 / float(sigma)
    inv_gamma = 1.0 / float(gamma)
    inv_zrange = 1.0 / (float(zfar) - float(znear))
    zfar = float(zfar)
    ragged = (total_p % tile) != 0

    def kernel(texels_ref, mask_ref, dists_ref, zbuf_ref, out_ref):
        # Blocks: texels (1, 3, K, T), mask/dists/zbuf (1, K, T), out (1, 4, T).
        num_k = mask_ref.shape[1]

        valid = mask_ref[0] != 0                                           # (K, T) bool
        if ragged:
            # Ragged last pixel tile: mask out-of-range lanes in-kernel instead of
            # pre-padding the big inputs through HBM (extra read+write pass).
            p0 = pl.program_id(1) * tile
            lane = jax.lax.broadcasted_iota(jnp.int32, valid.shape, 1)
            valid = jnp.logical_and(valid, (p0 + lane) < total_p)

        # Per-face sigmoid coverage probability (0 for empty / out-of-range lanes).
        prob = jnp.where(valid, jax.nn.sigmoid(dists_ref[0] * neg_inv_sigma), 0.0)

        # Silhouette alpha = 1 - prod_k (1 - p_k).  K is small & static: unrolled
        # elementwise multiplies (avoids a cross-sublane multiplicative reduce).
        one_minus = 1.0 - prob
        keep = one_minus[0:1]                                              # (1, T)
        for k in range(1, num_k):
            keep = keep * one_minus[k:k + 1]
        alpha = 1.0 - keep                                                 # (1, T)

        # Softmax-in-depth weights (exp-normalize against the per-pixel max).
        # Ordering matches pytorch3d (subtract the max BEFORE scaling by 1/gamma) to
        # avoid amplifying rounding error through the 1e4 scale.
        z_inv = jnp.where(valid, (zfar - zbuf_ref[0]) * inv_zrange, 0.0)   # (K, T)
        z_inv_max = jnp.maximum(jnp.max(z_inv, axis=0, keepdims=True), eps)
        w = prob * jnp.exp((z_inv - z_inv_max) * inv_gamma)                # (K, T)
        delta = jnp.maximum(jnp.exp((eps - z_inv_max) * inv_gamma), eps)   # (1, T)
        denom = jnp.sum(w, axis=0, keepdims=True) + delta                  # (1, T)
        # Exact reciprocal: EUP slot, effectively free in this mem-bound kernel.
        inv_denom = pl.reciprocal(denom, approx=False)                     # (1, T)
        bgw = delta * inv_denom                                            # (1, T)

        # Per-channel weighted colors; texel planes are contiguous (K, T) slices,
        # cast to f32 one channel at a time (bf16 inputs supported).
        r = jnp.sum(w * texels_ref[0, 0].astype(jnp.float32), axis=0,
                    keepdims=True) * inv_denom + bg_r * bgw
        g = jnp.sum(w * texels_ref[0, 1].astype(jnp.float32), axis=0,
                    keepdims=True) * inv_denom + bg_g * bgw
        b = jnp.sum(w * texels_ref[0, 2].astype(jnp.float32), axis=0,
                    keepdims=True) * inv_denom + bg_b * bgw

        # Single lane-dense (4, T) store.
        out_ref[0] = jnp.concatenate([r, g, b, alpha], axis=0)

    return kernel


def _pick_pixel_tile(P, K, texel_bytes, vmem_budget_bytes, n_batch,
                     min_total_steps=8):
    """Pixel tile (multiple of 128 lanes) sized from a VMEM budget.

    Per-pixel VMEM per grid step counts the double-buffered input/output blocks
    (texels 3*K*texel_bytes, mask K*1, dists+zbuf 2*K*4, out 4*4) plus ~6 live
    (K, tile) f32 temporaries materialized inside the kernel.
    """
    per_pixel = 2 * (3 * K * texel_bytes + K * 1 + 2 * K * 4 + 4 * 4) + 6 * K * 4
    t = int(vmem_budget_bytes // per_pixel)
    t = (t // 128) * 128
    p_ceil = _round_up(P, 128)
    t = min(t, p_ceil)
    # Megacore / pipelining: when the batch is small, keep enough pixel tiles so both
    # TensorCores (v7x) get work and DMA still overlaps compute — but never shrink the
    # tile below 512 lanes just to add grid steps (small tiles fall off the HBM roofline).
    want_tiles = -(-min_total_steps // max(int(n_batch), 1))
    if want_tiles > 1:
        cap = _round_up(-(-P // want_tiles), 128)
        t = min(t, max(cap, 512))
    return max(t, 128)


def softmax_rgb_blend_pallas(texels, mask, dists, zbuf, *,
                             sigma=1e-4, gamma=1e-4,
                             background_color=(1.0, 1.0, 1.0),
                             znear=0.1, zfar=50.0,
                             vmem_budget_bytes=8 << 20,
                             vmem_limit_bytes=None):
    """Channels-first softmax RGB blend (pytorch3d softmax_rgb_blend math).

    texels: (N, 3, K, P)  f32 or bf16   P = H*W pixels (lane-dense trailing axis)
    mask:   (N, K, P)     int8 / bool   nonzero where pix_to_face >= 0
    dists:  (N, K, P)     f32           keep f32 (argument scaled by 1/sigma)
    zbuf:   (N, K, P)     f32           keep f32 (argument scaled by 1/gamma)
    Returns (N, 4, P) float32 (RGB + silhouette alpha), channels-first.

    vmem_budget_bytes bounds the per-step VMEM working set (double-buffered blocks +
    in-kernel temporaries).  The 8 MiB default fits every generation's default scoped
    VMEM (16 MiB v5e, 32 MiB v6e/v7x).  v6e can go to ~24 MiB (also raise
    vmem_limit_bytes, e.g. 48<<20); on v7x stay <= ~16-24 MiB and keep
    vmem_limit_bytes well under its 64 MiB physical VMEM.
    """
    N, C, K, P = texels.shape
    assert C == 3, texels.shape
    assert mask.shape == (N, K, P), mask.shape
    assert dists.shape == (N, K, P) and zbuf.shape == (N, K, P)

    if texels.dtype not in (jnp.bfloat16, jnp.float32):
        texels = texels.astype(jnp.float32)
    mask = mask.astype(jnp.int8)
    dists = dists.astype(jnp.float32)
    zbuf = zbuf.astype(jnp.float32)

    texel_bytes = jnp.dtype(texels.dtype).itemsize
    tile = _pick_pixel_tile(P, K, texel_bytes, vmem_budget_bytes, N)
    num_tiles = -(-P // tile)               # cdiv: no padding of the big inputs
    grid = (N, num_tiles)

    kernel = _make_blend_kernel(sigma, gamma, background_color, znear, zfar,
                                total_p=P, tile=tile)

    cp_kwargs = dict(dimension_semantics=("parallel", "parallel"))
    if vmem_limit_bytes is not None:
        cp_kwargs["vmem_limit_bytes"] = int(vmem_limit_bytes)

    out = pl.pallas_call(
        kernel,
        out_shape=jax.ShapeDtypeStruct((N, 4, P), jnp.float32),
        grid=grid,
        in_specs=[
            pl.BlockSpec((1, 3, K, tile), lambda n, p: (n, 0, 0, p)),
            pl.BlockSpec((1, K, tile), lambda n, p: (n, 0, p)),
            pl.BlockSpec((1, K, tile), lambda n, p: (n, 0, p)),
            pl.BlockSpec((1, K, tile), lambda n, p: (n, 0, p)),
        ],
        out_specs=pl.BlockSpec((1, 4, tile), lambda n, p: (n, 0, p)),
        compiler_params=pltpu.CompilerParams(**cp_kwargs),
    )(texels, mask, dists, zbuf)

    return out


def soft_simple_shader_images(texels, mask, dists, zbuf, image_hw, **blend_kwargs):
    """Optional PyTorch3D (N, H, W, 4) layout.  Prefer consuming the channels-first
    (N, 4, P) kernel output directly; this transpose is an extra HBM pass."""
    H, W = image_hw
    out = softmax_rgb_blend_pallas(texels, mask, dists, zbuf, **blend_kwargs)
    N = out.shape[0]
    assert out.shape[2] == H * W
    return jnp.transpose(out, (0, 2, 1)).reshape(N, H, W, 4)


# ---------------- pure-JAX reference (for correctness check) ----------------

def _reference_pixels(texels, pix_to_face, dists, zbuf, sigma, gamma, bg, znear, zfar):
    """Same math as pytorch3d softmax_rgb_blend, on the kernel layout.
    texels (N,3,K,P), others (N,K,P) -> (N,4,P)."""
    eps = 1e-10
    m = (pix_to_face >= 0).astype(jnp.float32)
    prob = jax.nn.sigmoid(-dists / sigma) * m
    alpha = 1.0 - jnp.prod(1.0 - prob, axis=1)                            # (N, P)
    z_inv = (zfar - zbuf) / (zfar - znear) * m
    z_inv_max = jnp.maximum(jnp.max(z_inv, axis=1, keepdims=True), eps)
    w_num = prob * jnp.exp((z_inv - z_inv_max) / gamma)
    delta = jnp.maximum(jnp.exp((eps - z_inv_max) / gamma), eps)          # (N, 1, P)
    denom = jnp.sum(w_num, axis=1, keepdims=True) + delta                 # (N, 1, P)
    wc = jnp.sum(w_num[:, None, :, :] * texels, axis=2)                   # (N, 3, P)
    bg_col = jnp.asarray(bg, jnp.float32).reshape(1, 3, 1)
    rgb = (wc + delta * bg_col) / denom
    return jnp.concatenate([rgb, alpha[:, None, :]], axis=1)              # (N, 4, P)


# ---------------- driver ----------------

if __name__ == "__main__":
    # P = 255 is deliberately NOT a multiple of 128 to exercise the ragged-tile
    # (cdiv grid + in-kernel lane mask) path with no input padding.
    N, H, W, K = 2, 15, 17, 4          # batch, image height/width, faces-per-pixel
    P = H * W
    znear, zfar = 0.1, 50.0
    sigma, gamma = 1e-4, 1e-4          # BlendParams defaults
    bg = (1.0, 1.0, 1.0)               # BlendParams default background color

    key = jax.random.PRNGKey(0)
    k1, k2, k3, k4 = jax.random.split(key, 4)

    # Renderer-side layout: bf16 colors + int8 validity mask (only the sign of
    # pix_to_face is needed); dists/zbuf stay f32 (scale-sensitive through 1/sigma,
    # 1/gamma).
    texels = jax.random.uniform(k1, (N, 3, K, P), jnp.float32).astype(jnp.bfloat16)
    pix_to_face = jax.random.randint(k2, (N, K, P), -1, 8, jnp.int32)     # -1 = empty frag
    frag_mask = (pix_to_face >= 0).astype(jnp.int8)                       # renderer emits this
    dists = jax.random.normal(k3, (N, K, P), jnp.float32) * 1e-4          # signed distances
    zbuf = jax.random.uniform(k4, (N, K, P), jnp.float32,
                              minval=1.0, maxval=40.0)                    # depth buffer

    # Tiny budget so the toy image still exercises the multi-tile grid path
    # (two 128-lane pixel tiles, the second one ragged); real renders use the default.
    out = softmax_rgb_blend_pallas(
        texels, frag_mask, dists, zbuf,
        sigma=sigma, gamma=gamma, background_color=bg, znear=znear, zfar=zfar,
        vmem_budget_bytes=32 * 1024)
    out = jax.block_until_ready(out)                                      # (N, 4, P)

    # Optional PyTorch3D image layout (kept out of the hot path).
    images = jnp.transpose(out, (0, 2, 1)).reshape(N, H, W, 4)

    ref = _reference_pixels(texels.astype(jnp.float32), pix_to_face, dists, zbuf,
                            sigma, gamma, bg, znear, zfar)                # (N, 4, P)
    ref_img = jnp.transpose(ref, (0, 2, 1)).reshape(N, H, W, 4)

    assert out.shape == (N, 4, P)
    assert images.shape == (N, H, W, 4)
    # Exact reciprocal now; residual tolerance covers f32 rounding of the exp argument
    # amplified by 1/gamma = 1e4 (constant-reciprocal multiplies vs. divisions).
    assert jnp.allclose(out, ref, rtol=2e-3, atol=2e-3), "mismatch vs. reference"
    assert jnp.allclose(images, ref_img, rtol=2e-3, atol=2e-3), "mismatch vs. reference"

    print("KERNEL_OK")
</pallas_src>

<mosaic_0001>
module attributes {stable_mosaic.version = 11 : i64} {
  func.func @kernel(%arg0: i32, %arg1: i32, %arg2: memref<1x3x4x128xbf16, #tpu.memory_space<vmem>>, %arg3: memref<1x4x128xi8, #tpu.memory_space<vmem>>, %arg4: memref<1x4x128xf32, #tpu.memory_space<vmem>>, %arg5: memref<1x4x128xf32, #tpu.memory_space<vmem>>, %arg6: memref<1x4x128xf32, #tpu.memory_space<vmem>>) attributes {dimension_semantics = [#tpu.dimension_semantics<parallel>, #tpu.dimension_semantics<parallel>], iteration_bounds = array<i64: 2, 2>, scalar_prefetch = 0 : i64, scratch_operands = 0 : i64, tpu.core_type = #tpu.core_type<tc>, window_params = [{transform_indices = @transform_0, window_bounds = array<i64: 1, 3, 4, 128>}, {transform_indices = @transform_1, window_bounds = array<i64: 1, 4, 128>}, {transform_indices = @transform_2, window_bounds = array<i64: 1, 4, 128>}, {transform_indices = @transform_3, window_bounds = array<i64: 1, 4, 128>}, {transform_indices = @transform_4, window_bounds = array<i64: 1, 4, 128>}]} {
    %c0 = arith.constant 0 : index
    %c0_0 = arith.constant 0 : index
    %c0_1 = arith.constant 0 : index
    %0 = vector.load %arg3[%c0, %c0_0, %c0_1] : memref<1x4x128xi8, #tpu.memory_space<vmem>>, vector<1x4x128xi8>
    %1 = vector.shape_cast %0 : vector<1x4x128xi8> to vector<4x128xi8>
    %c0_i8 = arith.constant 0 : i8
    %2 = vector.broadcast %c0_i8 : i8 to vector<4x128xi8>
    %3 = arith.cmpi ne, %1, %2 : vector<4x128xi8>
    %c128_i32 = arith.constant 128 : i32
    %4 = arith.muli %arg1, %c128_i32 : i32
    %5 = tpu.iota {dimensions = array<i32: 1>} : vector<4x128xi32>
    %6 = vector.broadcast %4 : i32 to vector<4x128xi32>
    %7 = arith.addi %6, %5 : vector<4x128xi32>
    %c255_i32 = arith.constant 255 : i32
    %8 = vector.broadcast %c255_i32 : i32 to vector<4x128xi32>
    %9 = arith.cmpi slt, %7, %8 : vector<4x128xi32>
    %10 = arith.andi %3, %9 : vector<4x128xi1>
    %c0_2 = arith.constant 0 : index
    %c0_3 = arith.constant 0 : index
    %c0_4 = arith.constant 0 : index
    %11 = vector.load %arg4[%c0_2, %c0_3, %c0_4] : memref<1x4x128xf32, #tpu.memory_space<vmem>>, vector<1x4x128xf32>
    %12 = vector.shape_cast %11 : vector<1x4x128xf32> to vector<4x128xf32>
    %cst = arith.constant -1.000000e+04 : f32
    %13 = vector.broadcast %cst : f32 to vector<4x128xf32>
    %14 = arith.mulf %12, %13 : vector<4x128xf32>
    %15 = arith.negf %14 : vector<4x128xf32>
    %16 = math.exp %15 : vector<4x128xf32>
    %cst_5 = arith.constant 1.000000e+00 : f32
    %17 = vector.broadcast %cst_5 : f32 to vector<4x128xf32>
    %18 = arith.addf %17, %16 : vector<4x128xf32>
    %19 = arith.divf %17, %18 : vector<4x128xf32>
    %cst_6 = arith.constant 0.000000e+00 : f32
    %20 = vector.broadcast %cst_6 : f32 to vector<4x128xf32>
    %21 = arith.select %10, %19, %20 : vector<4x128xi1>, vector<4x128xf32>
    %cst_7 = arith.constant 1.000000e+00 : f32
    %22 = vector.broadcast %cst_7 : f32 to vector<4x128xf32>
    %23 = arith.subf %22, %21 : vector<4x128xf32>
    %24 = vector.extract_strided_slice %23 {offsets = [0, 0], sizes = [1, 128], strides = [1, 1]} : vector<4x128xf32> to vector<1x128xf32>
    %25 = vector.extract_strided_slice %23 {offsets = [1, 0], sizes = [1, 128], strides = [1, 1]} : vector<4x128xf32> to vector<1x128xf32>
    %26 = arith.mulf %24, %25 : vector<1x128xf32>
    %27 = vector.extract_strided_slice %23 {offsets = [2, 0], sizes = [1, 128], strides = [1, 1]} : vector<4x128xf32> to vector<1x128xf32>
    %28 = arith.mulf %26, %27 : vector<1x128xf32>
    %29 = vector.extract_strided_slice %23 {offsets = [3, 0], sizes = [1, 128], strides = [1, 1]} : vector<4x128xf32> to vector<1x128xf32>
    %30 = arith.mulf %28, %29 : vector<1x128xf32>
    %cst_8 = arith.constant 1.000000e+00 : f32
    %31 = vector.broadcast %cst_8 : f32 to vector<1x128xf32>
    %32 = arith.subf %31, %30 : vector<1x128xf32>
    %c0_9 = arith.constant 0 : index
    %c0_10 = arith.constant 0 : index
    %c0_11 = arith.constant 0 : index
    %33 = vector.load %arg5[%c0_9, %c0_10, %c0_11] : memref<1x4x128xf32, #tpu.memory_space<vmem>>, vector<1x4x128xf32>
    %34 = vector.shape_cast %33 : vector<1x4x128xf32> to vector<4x128xf32>
    %cst_12 = arith.constant 5.000000e+01 : f32
    %35 = vector.broadcast %cst_12 : f32 to vector<4x128xf32>
    %36 = arith.subf %35, %34 : vector<4x128xf32>
    %cst_13 = arith.constant 0.02004008 : f32
    %37 = vector.broadcast %cst_13 : f32 to vector<4x128xf32>
    %38 = arith.mulf %36, %37 : vector<4x128xf32>
    %cst_14 = arith.constant 0.000000e+00 : f32
    %39 = vector.broadcast %cst_14 : f32 to vector<4x128xf32>
    %40 = arith.select %10, %38, %39 : vector<4x128xi1>, vector<4x128xf32>
    %cst_15 = arith.constant dense<0xFF800000> : vector<128xf32>
    %41 = vector.multi_reduction <maximumf>, %40, %cst_15 [0] : vector<4x128xf32> to vector<128xf32>
    %42 = vector.shape_cast %41 : vector<128xf32> to vector<1x128xf32>
    %cst_16 = arith.constant 1.000000e-10 : f32
    %43 = vector.broadcast %cst_16 : f32 to vector<1x128xf32>
    %44 = arith.maximumf %42, %43 : vector<1x128xf32>
    %45 = vector.broadcast %44 : vector<1x128xf32> to vector<4x128xf32>
    %46 = arith.subf %40, %45 : vector<4x128xf32>
    %cst_17 = arith.constant 1.000000e+04 : f32
    %47 = vector.broadcast %cst_17 : f32 to vector<4x128xf32>
    %48 = arith.mulf %46, %47 : vector<4x128xf32>
    %49 = math.exp %48 : vector<4x128xf32>
    %50 = arith.mulf %21, %49 : vector<4x128xf32>
    %cst_18 = arith.constant 1.000000e-10 : f32
    %51 = vector.broadcast %cst_18 : f32 to vector<1x128xf32>
    %52 = arith.subf %51, %44 : vector<1x128xf32>
    %cst_19 = arith.constant 1.000000e+04 : f32
    %53 = vector.broadcast %cst_19 : f32 to vector<1x128xf32>
    %54 = arith.mulf %52, %53 : vector<1x128xf32>
    %55 = math.exp %54 : vector<1x128xf32>
    %cst_20 = arith.constant 1.000000e-10 : f32
    %56 = vector.broadcast %cst_20 : f32 to vector<1x128xf32>
    %57 = arith.maximumf %55, %56 : vector<1x128xf32>
    %cst_21 = arith.constant dense<0.000000e+00> : vector<128xf32>
    %58 = vector.multi_reduction <add>, %50, %cst_21 [0] : vector<4x128xf32> to vector<128xf32>
    %59 = vector.shape_cast %58 : vector<128xf32> to vector<1x128xf32>
    %60 = arith.addf %59, %57 : vector<1x128xf32>
    %61 = tpu.reciprocal %60 : vector<1x128xf32> -> vector<1x128xf32>
    %62 = arith.mulf %57, %61 : vector<1x128xf32>
    %c0_22 = arith.constant 0 : index
    %c0_23 = arith.constant 0 : index
    %c0_24 = arith.constant 0 : index
    %c0_25 = arith.constant 0 : index
    %63 = vector.load %arg2[%c0_22, %c0_23, %c0_24, %c0_25] : memref<1x3x4x128xbf16, #tpu.memory_space<vmem>>, vector<1x1x4x128xbf16>
    %64 = vector.shape_cast %63 : vector<1x1x4x128xbf16> to vector<4x128xbf16>
    %65 = arith.extf %64 : vector<4x128xbf16> to vector<4x128xf32>
    %66 = arith.mulf %50, %65 : vector<4x128xf32>
    %cst_26 = arith.constant dense<0.000000e+00> : vector<128xf32>
    %67 = vector.multi_reduction <add>, %66, %cst_26 [0] : vector<4x128xf32> to vector<128xf32>
    %68 = vector.shape_cast %67 : vector<128xf32> to vector<1x128xf32>
    %69 = arith.mulf %68, %61 : vector<1x128xf32>
    %cst_27 = arith.constant 1.000000e+00 : f32
    %70 = vector.broadcast %cst_27 : f32 to vector<1x128xf32>
    %71 = arith.mulf %70, %62 : vector<1x128xf32>
    %72 = arith.addf %69, %71 : vector<1x128xf32>
    %c0_28 = arith.constant 0 : index
    %c1 = arith.constant 1 : index
    %c0_29 = arith.constant 0 : index
    %c0_30 = arith.constant 0 : index
    %73 = vector.load %arg2[%c0_28, %c1, %c0_29, %c0_30] : memref<1x3x4x128xbf16, #tpu.memory_space<vmem>>, vector<1x1x4x128xbf16>
    %74 = vector.shape_cast %73 : vector<1x1x4x128xbf16> to vector<4x128xbf16>
    %75 = arith.extf %74 : vector<4x128xbf16> to vector<4x128xf32>
    %76 = arith.mulf %50, %75 : vector<4x128xf32>
    %cst_31 = arith.constant dense<0.000000e+00> : vector<128xf32>
    %77 = vector.multi_reduction <add>, %76, %cst_31 [0] : vector<4x128xf32> to vector<128xf32>
    %78 = vector.shape_cast %77 : vector<128xf32> to vector<1x128xf32>
    %79 = arith.mulf %78, %61 : vector<1x128xf32>
    %cst_32 = arith.constant 1.000000e+00 : f32
    %80 = vector.broadcast %cst_32 : f32 to vector<1x128xf32>
    %81 = arith.mulf %80, %62 : vector<1x128xf32>
    %82 = arith.addf %79, %81 : vector<1x128xf32>
    %c0_33 = arith.constant 0 : index
    %c2 = arith.constant 2 : index
    %c0_34 = arith.constant 0 : index
    %c0_35 = arith.constant 0 : index
    %83 = vector.load %arg2[%c0_33, %c2, %c0_34, %c0_35] : memref<1x3x4x128xbf16, #tpu.memory_space<vmem>>, vector<1x1x4x128xbf16>
    %84 = vector.shape_cast %83 : vector<1x1x4x128xbf16> to vector<4x128xbf16>
    %85 = arith.extf %84 : vector<4x128xbf16> to vector<4x128xf32>
    %86 = arith.mulf %50, %85 : vector<4x128xf32>
    %cst_36 = arith.constant dense<0.000000e+00> : vector<128xf32>
    %87 = vector.multi_reduction <add>, %86, %cst_36 [0] : vector<4x128xf32> to vector<128xf32>
    %88 = vector.shape_cast %87 : vector<128xf32> to vector<1x128xf32>
    %89 = arith.mulf %88, %61 : vector<1x128xf32>
    %cst_37 = arith.constant 1.000000e+00 : f32
    %90 = vector.broadcast %cst_37 : f32 to vector<1x128xf32>
    %91 = arith.mulf %90, %62 : vector<1x128xf32>
    %92 = arith.addf %89, %91 : vector<1x128xf32>
    %93 = tpu.concatenate %72, %82, %92, %32 in 0 : vector<1x128xf32>, vector<1x128xf32>, vector<1x128xf32>, vector<1x128xf32> -> vector<4x128xf32>
    %c0_38 = arith.constant 0 : index
    %c0_39 = arith.constant 0 : index
    %c0_40 = arith.constant 0 : index
    %94 = vector.load %arg6[%c0_38, %c0_39, %c0_40] : memref<1x4x128xf32, #tpu.memory_space<vmem>>, vector<1x4x128xf32>
    %95 = vector.shape_cast %94 : vector<1x4x128xf32> to vector<4x128xf32>
    %96 = vector.shape_cast %93 : vector<4x128xf32> to vector<1x4x128xf32>
    tpu.vector_store %arg6[%c0_38, %c0_39, %c0_40], %96 {strides = array<i32>} : memref<1x4x128xf32, #tpu.memory_space<vmem>>, vector<1x4x128xf32>,
    return
  }
  func.func @transform_0(%arg0: i32, %arg1: i32) -> (i32, i32, i32, i32) {
    %c0_i32 = arith.constant 0 : i32
    %c0_i32_0 = arith.constant 0 : i32
    %c0_i32_1 = arith.constant 0 : i32
    return %arg0, %c0_i32, %c0_i32_0, %arg1 : i32, i32, i32, i32
  }
  func.func @transform_1(%arg0: i32, %arg1: i32) -> (i32, i32, i32) {
    %c0_i32 = arith.constant 0 : i32
    %c0_i32_0 = arith.constant 0 : i32
    return %arg0, %c0_i32, %arg1 : i32, i32, i32
  }
  func.func @transform_2(%arg0: i32, %arg1: i32) -> (i32, i32, i32) {
    %c0_i32 = arith.constant 0 : i32
    %c0_i32_0 = arith.constant 0 : i32
    return %arg0, %c0_i32, %arg1 : i32, i32, i32
  }
  func.func @transform_3(%arg0: i32, %arg1: i32) -> (i32, i32, i32) {
    %c0_i32 = arith.constant 0 : i32
    %c0_i32_0 = arith.constant 0 : i32
    return %arg0, %c0_i32, %arg1 : i32, i32, i32
  }
  func.func @transform_4(%arg0: i32, %arg1: i32) -> (i32, i32, i32) {
    %c0_i32 = arith.constant 0 : i32
    %c0_i32_0 = arith.constant 0 : i32
    return %arg0, %c0_i32, %arg1 : i32, i32, i32
  }
}

</mosaic_0001>

<llo_original>
// kernel: tpu_custom_call.1
$region0: #{tpu_custom_call.1}
  #allocation0 [shape = 'u32[]', space=smem, size = 0x4, offset = 0x4, fixed_abs, tag = 'smem constant byte address 0x4 - core index']
  #allocation1 [shape = 'u32[72,128]{1,0:T(1,128)}', space=vmem, size = 0x9000, scoped, tag = 'internal scratch']
  %s0 = inlined_call_operand.hbm [shape: bf16[2,3,4,255], index: 0, kind: input, shape index: {}]
  %s1 = inlined_call_operand.hbm [shape: s8[2,4,255], index: 1, kind: input, shape index: {}]
  %s2 = inlined_call_operand.hbm [shape: f32[2,4,255], index: 2, kind: input, shape index: {}]
  %s3 = inlined_call_operand.hbm [shape: f32[2,4,255], index: 3, kind: input, shape index: {}]
  %s4 = inlined_call_operand.hbm [shape: f32[2,4,255], index: 4, kind: output, shape index: {}]
  %s5 = sld [smem:[#allocation0]]
  $region65: #{tpu_custom_call.1} parent=0
    _
  %s7 = ssub.s32 1, %s5
  %s8 = scalar_select 0, %s7, %s5
  $region1: #{tpu_custom_call.1} parent=0
    #allocation2 [shape = 'u8[6144]{0}', space=vmem, size = 0x1800, scoped, tag = 'input window, operand 0']
    #allocation3 [shape = 's32[2]{0}', space=sflag, size = 0x8, scoped, tag = 'scoped memory for tpu_custom_call.1']
    #allocation4 [shape = 's32[2]{0}', space=sflag, size = 0x8, scoped, tag = 'scoped memory for tpu_custom_call.1']
    #allocation5 [shape = 'u8[1024]{0}', space=vmem, size = 0x400, scoped, tag = 'input window, operand 1']
    #allocation6 [shape = 's32[2]{0}', space=sflag, size = 0x8, scoped, tag = 'scoped memory for tpu_custom_call.1']
    #allocation7 [shape = 'u8[4096]{0}', space=vmem, size = 0x1000, scoped, tag = 'input window, operand 2']
    #allocation8 [shape = 'u8[4096]{0}', space=vmem, size = 0x1000, scoped, tag = 'input window, operand 3']
    #allocation9 [shape = 's32[2]{0}', space=sflag, size = 0x8, scoped, tag = 'scoped memory for tpu_custom_call.1']
    #allocation10 [shape = 'u8[4096]{0}', space=vmem, size = 0x1000, scoped, tag = 'output window, operand 0']
    %9 = vsyncpa [#allocation3], 0
    %s10 = scalar_lea.sflag [#allocation3], 1
    %11 = vsyncpa %s10, 0
    %12 = vsyncpa [#allocation6], 0
    %s13 = scalar_lea.sflag [#allocation6], 1
    %14 = vsyncpa %s13, 0
    %15 = vsyncpa [#allocation9], 0
    %s16 = scalar_lea.sflag [#allocation9], 1
    %17 = vsyncpa %s16, 0
    %18 = vsyncpa [#allocation4], 0
    %s19 = scalar_lea.sflag [#allocation4], 1
    %20 = vsyncpa %s19, 0
    loop: start=0, step=1, limit=6
    $region2: #{tpu_custom_call.1} parent=1 // loop_pre_header
      _
    $region3: #{tpu_custom_call.1} parent=1 // loop_header
      %s22 = sphi 0, %s26
      %p23 = scmp.ge.s32.totalorder %s22, 6
      %s29 = sphi 0, %s41
      %s30 = sphi 0, %s37
      %s31 = sphi 0, %s29
      %s32 = sphi 0, %s30
      %s33 = sphi 0, %s31
      %s34 = sphi 0, %s32
      %s46 = sphi 0, %s48
      %s49 = sphi 0, %s46
      %s50 = sphi 0, %s49
      %s66 = sphi 0, %s50
      %s74 = sphi 0, %s76
      %s77 = sphi 0, %s74
      %s78 = sphi 0, %s77
      %s94 = sphi 0, %s78
      %s102 = sphi 0, %s104
      %s105 = sphi 0, %s102
      %s106 = sphi 0, %s105
      %s122 = sphi 0, %s106
      %s130 = sphi 0, %s132
      %s133 = sphi 0, %s130
      %s134 = sphi 0, %s133
      %s150 = sphi 0, %s134
      %s158 = sphi 0, %s160
      %s161 = sphi 0, %s158
      %s162 = sphi 0, %s161
      %s178 = sphi 0, %s162
    $region4: #{tpu_custom_call.1} parent=1 // loop_header_branch
      %25 = sbr.rel (%p23) target = $region8
    $region5: #{tpu_custom_call.1} parent=1 // loop_body
      %s27 = ssub.s32 %s22, 1
      %s28 = ssub.s32 %s22, 2
      %s35 = sadd.s32 1, %s30
      %p36 = scmp.ge.s32.totalorder %s35, 2
      %s37 = scalar_select %p36, 0, %s35
      %s38 = sadd.s32 1, %s29
      %s39 = scalar_select %p36, %s38, %s29
      %p40 = scmp.ge.s32.totalorder %s39, 2
      %s41 = scalar_select %p40, 0, %s39
      %s42 = ssub.s32 %s29, %s41
      %s43 = ssub.s32 %s30, %s37
      %s44 = sor.u32 %s42, %s43
      %p45 = scmp.eq.s32.totalorder %s44, 0
      %s47 = sadd.s32 %s46, 1
      %s48 = scalar_select %p45, %s46, %s47
      %p51 = pneg %p45
      %p52 = scmp.eq.s32.totalorder %s22, 3
      %p53 = por %p51, %p52
      %p54 = scmp.ne.s32.totalorder %s46, %s49
      %p55 = scmp.eq.s32.totalorder %s22, 0
      %p56 = por %p54, %p55
      %p57 = scmp.ne.s32.totalorder %s46, %s49
      %p58 = scmp.eq.s32.totalorder %s27, 3
      %p59 = por %p57, %p58
      %p60 = scmp.ne.s32.totalorder %s49, %s50
      %p61 = scmp.eq.s32.totalorder %s27, 0
      %p62 = por %p60, %p61
      %p63 = scmp.ne.s32.totalorder %s49, %s50
      %p64 = scmp.eq.s32.totalorder %s28, 3
      %p65 = por %p63, %p64
      %p67 = scmp.ne.s32.totalorder %s50, %s66
      %p68 = scmp.eq.s32.totalorder %s28, 0
      %p69 = por %p67, %p68
      %s70 = ssub.s32 %s29, %s41
      %s71 = ssub.s32 %s30, %s37
      %s72 = sor.u32 %s70, %s71
      %p73 = scmp.eq.s32.totalorder %s72, 0
      %s75 = sadd.s32 %s74, 1
      %s76 = scalar_select %p73, %s74, %s75
      %p79 = pneg %p73
      %p80 = scmp.eq.s32.totalorder %s22, 3
      %p81 = por %p79, %p80
      %p82 = scmp.ne.s32.totalorder %s74, %s77
      %p83 = scmp.eq.s32.totalorder %s22, 0
      %p84 = por %p82, %p83
      %p85 = scmp.ne.s32.totalorder %s74, %s77
      %p86 = scmp.eq.s32.totalorder %s27, 3
      %p87 = por %p85, %p86
      %p88 = scmp.ne.s32.totalorder %s77, %s78
      %p89 = scmp.eq.s32.totalorder %s27, 0
      %p90 = por %p88, %p89
      %p91 = scmp.ne.s32.totalorder %s77, %s78
      %p92 = scmp.eq.s32.totalorder %s28, 3
      %p93 = por %p91, %p92
      %p95 = scmp.ne.s32.totalorder %s78, %s94
      %p96 = scmp.eq.s32.totalorder %s28, 0
      %p97 = por %p95, %p96
      %s98 = ssub.s32 %s29, %s41
      %s99 = ssub.s32 %s30, %s37
      %s100 = sor.u32 %s98, %s99
      %p101 = scmp.eq.s32.totalorder %s100, 0
      %s103 = sadd.s32 %s102, 1
      %s104 = scalar_select %p101, %s102, %s103
      %p107 = pneg %p101
      %p108 = scmp.eq.s32.totalorder %s22, 3
      %p109 = por %p107, %p108
      %p110 = scmp.ne.s32.totalorder %s102, %s105
      %p111 = scmp.eq.s32.totalorder %s22, 0
      %p112 = por %p110, %p111
      %p113 = scmp.ne.s32.totalorder %s102, %s105
      %p114 = scmp.eq.s32.totalorder %s27, 3
      %p115 = por %p113, %p114
      %p116 = scmp.ne.s32.totalorder %s105, %s106
      %p117 = scmp.eq.s32.totalorder %s27, 0
      %p118 = por %p116, %p117
      %p119 = scmp.ne.s32.totalorder %s105, %s106
      %p120 = scmp.eq.s32.totalorder %s28, 3
      %p121 = por %p119, %p120
      %p123 = scmp.ne.s32.totalorder %s106, %s122
      %p124 = scmp.eq.s32.totalorder %s28, 0
      %p125 = por %p123, %p124
      %s126 = ssub.s32 %s29, %s41
      %s127 = ssub.s32 %s30, %s37
      %s128 = sor.u32 %s126, %s127
      %p129 = scmp.eq.s32.totalorder %s128, 0
      %s131 = sadd.s32 %s130, 1
      %s132 = scalar_select %p129, %s130, %s131
      %p135 = pneg %p129
      %p136 = scmp.eq.s32.totalorder %s22, 3
      %p137 = por %p135, %p136
      %p138 = scmp.ne.s32.totalorder %s130, %s133
      %p139 = scmp.eq.s32.totalorder %s22, 0
      %p140 = por %p138, %p139
      %p141 = scmp.ne.s32.totalorder %s130, %s133
      %p142 = scmp.eq.s32.totalorder %s27, 3
      %p143 = por %p141, %p142
      %p144 = scmp.ne.s32.totalorder %s133, %s134
      %p145 = scmp.eq.s32.totalorder %s27, 0
      %p146 = por %p144, %p145
      %p147 = scmp.ne.s32.totalorder %s133, %s134
      %p148 = scmp.eq.s32.totalorder %s28, 3
      %p149 = por %p147, %p148
      %p151 = scmp.ne.s32.totalorder %s134, %s150
      %p152 = scmp.eq.s32.totalorder %s28, 0
      %p153 = por %p151, %p152
      %s154 = ssub.s32 %s29, %s41
      %s155 = ssub.s32 %s30, %s37
      %s156 = sor.u32 %s154, %s155
      %p157 = scmp.eq.s32.totalorder %s156, 0
      %s159 = sadd.s32 %s158, 1
      %s160 = scalar_select %p157, %s158, %s159
      %p163 = pneg %p157
      %p164 = scmp.eq.s32.totalorder %s22, 3
      %p165 = por %p163, %p164
      %p166 = scmp.ne.s32.totalorder %s158, %s161
      %p167 = scmp.eq.s32.totalorder %s22, 0
      %p168 = por %p166, %p167
      %p169 = scmp.ne.s32.totalorder %s158, %s161
      %p170 = scmp.eq.s32.totalorder %s27, 3
      %p171 = por %p169, %p170
      %p172 = scmp.ne.s32.totalorder %s161, %s162
      %p173 = scmp.eq.s32.totalorder %s27, 0
      %p174 = por %p172, %p173
      %p175 = scmp.ne.s32.totalorder %s161, %s162
      %p176 = scmp.eq.s32.totalorder %s28, 3
      %p177 = por %p175, %p176
      %p179 = scmp.ne.s32.totalorder %s162, %s178
      %p180 = scmp.eq.s32.totalorder %s28, 0
      %p181 = por %p179, %p180
      %p182 = scmp.le.s32.totalorder 1, %s22
      %p183 = scmp.lt.s32.totalorder %s22, 5
      %p184 = pnand %p182, %p183
      %p185 = pneg %p184
      // Predicated region
      $region9: #{tpu_custom_call.1} parent=5 // pred_check
        _
      $region10: #{tpu_custom_call.1} parent=5 // pred_check_branch
        %187 = sbr.rel (%p184) target = $region12
      $region11: #{tpu_custom_call.1} parent=5 // pred_region
        %s188 = ssub.s32 %s22, 1
      $region12: #{tpu_custom_call.1} parent=5 // pred_fallthru
        _
      %p189 = scmp.lt.s32.totalorder %s22, 4
      // Predicated region
      $region13: #{tpu_custom_call.1} parent=5 // pred_check
        %p190 = pneg %p189
      $region14: #{tpu_custom_call.1} parent=5 // pred_check_branch
        %192 = sbr.rel (%p190) target = $region16
      $region15: #{tpu_custom_call.1} parent=5 // pred_region
        // Predicated region
        $region17: #{tpu_custom_call.1} parent=15 // pred_check
          %p193 = pneg %p56
        $region18: #{tpu_custom_call.1} parent=15 // pred_check_branch
          %195 = sbr.rel (%p193) target = $region20
        $region19: #{tpu_custom_call.1} parent=15 // pred_region
          %s196 = sand.u32 %s46, 1
          %s197 = scalar_lea.sflag [#allocation3], %s196
          %s198 = sand.u32 %s46, 1
          %s199 = smul.addr %s198, 6
          %s200 = scalar_lea.vmem [#allocation2], %s199
          %202 = vsyncadd %s197, 0
          %s203 = smul.addr %s29, 6
          %s204 = sadd.s32 %s30, %s203
          %s205 = smul.addr %s204, 2
          %s206 = scalar_lea.hbm %s0, %s205
          %s207 = sshll.u32 %s206, 4
          %s208 = int_to_ptr.hbm [resolvable:$true] %s207
          %s209 = sshll.u32 %s200, 4
          %s210 = int_to_ptr.vmem [resolvable:$true] %s209
          %215 = dma.hbm_to_vmem [thread:$0]  %s208, 96, %s210, %s197, 64, 32, 2
        $region20: #{tpu_custom_call.1} parent=15 // pred_fallthru
          _
        // Predicated region
        $region21: #{tpu_custom_call.1} parent=15 // pred_check
          %p216 = pneg %p84
        $region22: #{tpu_custom_call.1} parent=15 // pred_check_branch
          %218 = sbr.rel (%p216) target = $region24
        $region23: #{tpu_custom_call.1} parent=15 // pred_region
          %s219 = sand.u32 %s22, 1
          %s220 = scalar_lea.sflag [#allocation6], %s219
          %s221 = sand.u32 %s74, 1
          %s222 = scalar_lea.vmem [#allocation5], %s221
          %224 = vsyncadd %s220, 0
          %s225 = smul.addr %s29, 2
          %s226 = sadd.s32 %s30, %s225
          %s227 = scalar_lea.hbm %s1, %s226
          %s229 = sshll.u32 %s227, 4
          %s230 = int_to_ptr.hbm [resolvable:$true] %s229
          %s231 = sshll.u32 %s222, 4
          %s232 = int_to_ptr.vmem [resolvable:$true] %s231
          %234 = dma.hbm_to_vmem [thread:$0]  %s230, 16, %s232, %s220
        $region24: #{tpu_custom_call.1} parent=15 // pred_fallthru
          _
        // Predicated region
        $region25: #{tpu_custom_call.1} parent=15 // pred_check
          %p235 = pneg %p112
        $region26: #{tpu_custom_call.1} parent=15 // pred_check_branch
          %237 = sbr.rel (%p235) target = $region28
        $region27: #{tpu_custom_call.1} parent=15 // pred_region
          %s238 = sand.u32 %s22, 1
          %s239 = scalar_lea.sflag [#allocation6], %s238
          %s240 = sand.u32 %s102, 1
          %s241 = smul.addr %s240, 4
          %s242 = scalar_lea.vmem [#allocation7], %s241
          %244 = vsyncadd %s239, 0
          %s245 = smul.addr %s29, 2
          %s246 = sadd.s32 %s30, %s245
          %s247 = smul.addr %s246, 4
          %s248 = scalar_lea.hbm %s2, %s247
          %s250 = sshll.u32 %s248, 4
          %s251 = int_to_ptr.hbm [resolvable:$true] %s250
          %s252 = sshll.u32 %s242, 4
          %s253 = int_to_ptr.vmem [resolvable:$true] %s252
          %255 = dma.hbm_to_vmem [thread:$0]  %s251, 64, %s253, %s239
        $region28: #{tpu_custom_call.1} parent=15 // pred_fallthru
          _
        // Predicated region
        $region29: #{tpu_custom_call.1} parent=15 // pred_check
          %p256 = pneg %p140
        $region30: #{tpu_custom_call.1} parent=15 // pred_check_branch
          %258 = sbr.rel (%p256) target = $region32
        $region31: #{tpu_custom_call.1} parent=15 // pred_region
          %s259 = sand.u32 %s130, 1
          %s260 = scalar_lea.sflag [#allocation9], %s259
          %s261 = sand.u32 %s130, 1
          %s262 = smul.addr %s261, 4
          %s263 = scalar_lea.vmem [#allocation8], %s262
          %265 = vsyncadd %s260, 0
          %s266 = smul.addr %s29, 2
          %s267 = sadd.s32 %s30, %s266
          %s268 = smul.addr %s267, 4
          %s269 = scalar_lea.hbm %s3, %s268
          %s271 = sshll.u32 %s269, 4
          %s272 = int_to_ptr.hbm [resolvable:$true] %s271
          %s273 = sshll.u32 %s263, 4
          %s274 = int_to_ptr.vmem [resolvable:$true] %s273
          %276 = dma.hbm_to_vmem [thread:$0]  %s272, 64, %s274, %s260
        $region32: #{tpu_custom_call.1} parent=15 // pred_fallthru
          _
      $region16: #{tpu_custom_call.1} parent=5 // pred_fallthru
        _
      %p277 = scmp.le.s32.totalorder 1, %s22
      %p278 = scmp.lt.s32.totalorder %s22, 5
      %p279 = pnand %p277, %p278
      %p280 = pneg %p279
      // Predicated region
      $region33: #{tpu_custom_call.1} parent=5 // pred_check
        _
      $region34: #{tpu_custom_call.1} parent=5 // pred_check_branch
        %282 = sbr.rel (%p279) target = $region36
      $region35: #{tpu_custom_call.1} parent=5 // pred_region
        %s283 = ssub.s32 %s22, 1
        %s284 = sand.u32 %s49, 1
        %s285 = scalar_lea.sflag [#allocation3], %s284
        %s286 = sand.u32 %s49, 1
        %s287 = smul.addr %s286, 6
        %s288 = scalar_lea.vmem [#allocation2], %s287
        // Predicated region
        $region37: #{tpu_custom_call.1} parent=35 // pred_check
          %p289 = pneg %p62
        $region38: #{tpu_custom_call.1} parent=35 // pred_check_branch
          %291 = sbr.rel (%p289) target = $region40
        $region39: #{tpu_custom_call.1} parent=35 // pred_region
          %293 = dma.done %s285, 96
        $region40: #{tpu_custom_call.1} parent=35 // pred_fallthru
          _
        %s294 = sand.u32 %s27, 1
        %s295 = scalar_lea.sflag [#allocation6], %s294
        %s296 = sand.u32 %s77, 1
        %s297 = scalar_lea.vmem [#allocation5], %s296
        // Predicated region
        $region41: #{tpu_custom_call.1} parent=35 // pred_check
          %p298 = pneg %p90
        $region42: #{tpu_custom_call.1} parent=35 // pred_check_branch
          %300 = sbr.rel (%p298) target = $region44
        $region43: #{tpu_custom_call.1} parent=35 // pred_region
          %302 = dma.done %s295, 16
        $region44: #{tpu_custom_call.1} parent=35 // pred_fallthru
          _
        %s303 = sand.u32 %s27, 1
        %s304 = scalar_lea.sflag [#allocation6], %s303
        %s305 = sand.u32 %s105, 1
        %s306 = smul.addr %s305, 4
        %s307 = scalar_lea.vmem [#allocation7], %s306
        // Predicated region
        $region45: #{tpu_custom_call.1} parent=35 // pred_check
          %p308 = pneg %p118
        $region46: #{tpu_custom_call.1} parent=35 // pred_check_branch
          %310 = sbr.rel (%p308) target = $region48
        $region47: #{tpu_custom_call.1} parent=35 // pred_region
          %312 = dma.done %s304, 64
        $region48: #{tpu_custom_call.1} parent=35 // pred_fallthru
          _
        %s313 = sand.u32 %s133, 1
        %s314 = scalar_lea.sflag [#allocation9], %s313
        %s315 = sand.u32 %s133, 1
        %s316 = smul.addr %s315, 4
        %s317 = scalar_lea.vmem [#allocation8], %s316
        // Predicated region
        $region49: #{tpu_custom_call.1} parent=35 // pred_check
          %p318 = pneg %p146
        $region50: #{tpu_custom_call.1} parent=35 // pred_check_branch
          %320 = sbr.rel (%p318) target = $region52
        $region51: #{tpu_custom_call.1} parent=35 // pred_region
          %322 = dma.done %s314, 64
        $region52: #{tpu_custom_call.1} parent=35 // pred_fallthru
          _
        %s323 = sand.u32 %s49, 1
        %s324 = scalar_lea.sflag [#allocation3], %s323
        %s325 = sand.u32 %s49, 1
        %s326 = smul.addr %s325, 6
        %s327 = scalar_lea.vmem [#allocation2], %s326
        %p328 = pneg %p62
        %p329 = pneg %p59
        %s330 = sand.u32 %s27, 1
        %s331 = scalar_lea.sflag [#allocation6], %s330
        %s332 = sand.u32 %s77, 1
        %s333 = scalar_lea.vmem [#allocation5], %s332
        %p334 = pneg %p90
        %p335 = pneg %p87
        %s336 = sand.u32 %s27, 1
        %s337 = scalar_lea.sflag [#allocation6], %s336
        %s338 = sand.u32 %s105, 1
        %s339 = smul.addr %s338, 4
        %s340 = scalar_lea.vmem [#allocation7], %s339
        %p341 = pneg %p118
        %p342 = pneg %p115
        %s343 = sand.u32 %s133, 1
        %s344 = scalar_lea.sflag [#allocation9], %s343
        %s345 = sand.u32 %s133, 1
        %s346 = smul.addr %s345, 4
        %s347 = scalar_lea.vmem [#allocation8], %s346
        %p348 = pneg %p146
        %p349 = pneg %p143
        %p350 = pneg %p174
        %p351 = pneg %p171
        %s352 = sand.u32 %s161, 1
        %s353 = scalar_lea.sflag [#allocation4], %s352
        %s354 = sand.u32 %s161, 1
        %s355 = smul.addr %s354, 4
        %s356 = scalar_lea.vmem [#allocation10], %s355
        %v359 = vld [vmem:[%s297] sm:$0x1]
        %vm360 = vnez %v359
        %s361 = smul.u32 %s32, 128
        %v362 = vlaneseq
        %v363 = vand.u32 %v362, 127
        %v364 = vstv %s361
        %v365 = vadd.s32 %v364, %v363
        %vm366 = vcmp.lt.s32.totalorder %v365, 255
        %v367 = vsel %vm366, 1, 0
        %v368 = vpack.c.b16 %v367, %v367
        %v369 = vpack.c.b8 %v368, %v368
        %vm370 = vnez %v369
        %vm371 = vmand %vm360, %vm370
        %v372 = vld [vmem:[%s307] sm:$0xf]
        %v373 = vmul.f32 %v372, -10000.0
        %v374 = vxor.u32 %v373, 2147483648
        %v375 = vmul.f32 %v374, 1.442695
        %v376 = vpow.pop %v375
        %v377 = vadd.f32 %v376, 1.0
        %v378 = vrcp.pop %v377
        %v379 = vmul.f32 %v377, %v378
        %v380 = vsub.f32 1.0, %v379
        %v381 = vmul.f32 %v378, %v380
        %v382 = vadd.f32 %v378, %v381
        %vm383 = vweird.f32 %v377
        %vm384 = vweird.f32 %v378
        %vm385 = vmor %vm383, %vm384
        %v386 = vsel %vm385, %v378, %v382
        %v387 = vand.u32 2147483647, %v377
        %vm388 = vcmp.eq.f32.partialorder %v387, 8.507059e+37
        %v389 = vand.u32 %v377, 2147483648
        %v390 = vor.u32 1.1754944e-38, %v389
        %v391 = vsel %vm388, %v390, %v386
        %v392 = vmul.f32 1.0, %v391
        %v393 = vsel %vm371, 16843009, 0
        %v394 = vunpack.c.0.s8 %v393
        %vm395 = vcmp.ne.s32.totalorder %v394, 0
        %v396 = vsel %vm395, %v392, 0.0
        %v397 = vsub.f32 1.0, %v396
        %v399 = vrot.slane %v397, 1
        %v401 = vmul.f32 %v397, %v399
        %v402 = vrot.slane %v397, 2
        %v404 = vmul.f32 %v401, %v402
        %v405 = vrot.slane %v397, 3
        %v407 = vmul.f32 %v404, %v405
        %v408 = vsub.f32 1.0, %v407
        %v409 = vld [vmem:[%s317] sm:$0xf]
        %v410 = vsub.f32 50.0, %v409
        %v411 = vmul.f32 %v410, 0.02004008
        %v412 = vsel %vm395, %v411, 0.0
        %vm413 = vcmask 1043456
        %v414 = vsel %vm413, %v412, -inf
        %v415 = vrot.slane %v414, 4
        %v416 = vmax.f32 %v414, %v415
        %v417 = vrot.slane %v416, 2
        %v418 = vmax.f32 %v416, %v417
        %v419 = vrot.slane %v418, 1
        %v420 = vmax.f32 %v418, %v419
        %v421 = vmax.f32 %v420, 1e-10
        %v422 = vsub.f32 %v412, %v421
        %v423 = vmul.f32 %v422, 10000.0
        %v424 = vmul.f32 %v423, 1.442695
        %v425 = vpow.pop %v424
        %v426 = vmul.f32 %v396, %v425
        %v427 = vsub.f32 1e-10, %v421
        %v428 = vmul.f32 %v427, 10000.0
        %v429 = vmul.f32 %v428, 1.442695
        %v430 = vpow.pop %v429
        %v431 = vmax.f32 %v430, 1e-10
        %v432 = vsel %vm413, %v426, 0.0
        %v433 = vrot.slane %v432, 4
        %v434 = vadd.f32 %v432, %v433
        %v435 = vrot.slane %v434, 2
        %v436 = vadd.f32 %v434, %v435
        %v437 = vrot.slane %v436, 1
        %v438 = vadd.f32 %v436, %v437
        %v439 = vadd.f32 %v438, %v431
        %v440 = vrcp.pop %v439
        %v441 = vmul.f32 %v439, %v440
        %v442 = vsub.f32 1.0, %v441
        %v443 = vmul.f32 %v440, %v442
        %v444 = vadd.f32 %v440, %v443
        %vm445 = vweird.f32 %v439
        %vm446 = vweird.f32 %v440
        %vm447 = vmor %vm445, %vm446
        %v448 = vsel %vm447, %v440, %v444
        %v449 = vand.u32 2147483647, %v439
        %vm450 = vcmp.eq.f32.partialorder %v449, 8.507059e+37
        %v451 = vand.u32 %v439, 2147483648
        %v452 = vor.u32 1.1754944e-38, %v451
        %v453 = vsel %vm450, %v452, %v448
        %v454 = vmul.f32 %v431, %v453
        %v455 = vld [vmem:[%s288] sm:$0x3]
        %v456 = vunpack.c.l.bf16 %v455
        %v457 = vmul.f32 %v426, %v456
        %v458 = vsel %vm413, %v457, 0.0
        %v459 = vrot.slane %v458, 4
        %v460 = vadd.f32 %v458, %v459
        %v461 = vrot.slane %v460, 2
        %v462 = vadd.f32 %v460, %v461
        %v463 = vrot.slane %v462, 1
        %v464 = vadd.f32 %v462, %v463
        %v465 = vmul.f32 %v464, %v453
        %v466 = vadd.f32 %v465, %v454
        %s467 = scalar_lea.vmem %s288, 2 [#allocation2]
        %v468 = vld [vmem:[%s467] sm:$0x3]
        %v469 = vunpack.c.l.bf16 %v468
        %v470 = vmul.f32 %v426, %v469
        %v471 = vsel %vm413, %v470, 0.0
        %v472 = vrot.slane %v471, 4
        %v473 = vadd.f32 %v471, %v472
        %v474 = vrot.slane %v473, 2
        %v475 = vadd.f32 %v473, %v474
        %v476 = vrot.slane %v475, 1
        %v477 = vadd.f32 %v475, %v476
        %v478 = vmul.f32 %v477, %v453
        %v479 = vadd.f32 %v478, %v454
        %s480 = scalar_lea.vmem %s288, 4 [#allocation2]
        %v481 = vld [vmem:[%s480] sm:$0x3]
        %v482 = vunpack.c.l.bf16 %v481
        %v483 = vmul.f32 %v426, %v482
        %v484 = vsel %vm413, %v483, 0.0
        %v485 = vrot.slane %v484, 4
        %v486 = vadd.f32 %v484, %v485
        %v487 = vrot.slane %v486, 2
        %v488 = vadd.f32 %v486, %v487
        %v489 = vrot.slane %v488, 1
        %v490 = vadd.f32 %v488, %v489
        %v491 = vmul.f32 %v490, %v453
        %v492 = vadd.f32 %v491, %v454
        %v494 = vrot.slane %v408, 5
        %vm496 = vcmask 1040384
        %v497 = vsel %vm496, %v466, %v479
        %vm498 = vcmask 1041408
        %v499 = vsel %vm498, %v497, %v492
        %vm500 = vcmask 1042432
        %v501 = vsel %vm500, %v499, %v494
        %502 = vst [vmem:[%s356] sm:$0xf] %v501
        %s503 = sand.u32 %s161, 1
        %s504 = scalar_lea.sflag [#allocation4], %s503
        %s505 = sand.u32 %s161, 1
        %s506 = smul.addr %s505, 4
        %s507 = scalar_lea.vmem [#allocation10], %s506
        // Predicated region
        $region53: #{tpu_custom_call.1} parent=35 // pred_check
          %p508 = pneg %p171
        $region54: #{tpu_custom_call.1} parent=35 // pred_check_branch
          %510 = sbr.rel (%p508) target = $region56
        $region55: #{tpu_custom_call.1} parent=35 // pred_region
          %512 = vsyncadd %s504, 0
          %s513 = smul.addr %s31, 2
          %s514 = sadd.s32 %s32, %s513
          %s515 = smul.addr %s514, 4
          %s516 = scalar_lea.hbm %s4, %s515
          %s518 = sshll.u32 %s507, 4
          %s519 = int_to_ptr.vmem [resolvable:$true] %s518
          %s520 = sshll.u32 %s516, 4
          %s521 = int_to_ptr.hbm [resolvable:$true] %s520
          %523 = dma.vmem_to_hbm [thread:$0]  %s519, 64, %s521, %s504
        $region56: #{tpu_custom_call.1} parent=35 // pred_fallthru
          _
      $region36: #{tpu_custom_call.1} parent=5 // pred_fallthru
        _
      %p524 = scmp.le.s32.totalorder 2, %s22
      // Predicated region
      $region57: #{tpu_custom_call.1} parent=5 // pred_check
        %p525 = pneg %p524
      $region58: #{tpu_custom_call.1} parent=5 // pred_check_branch
        %527 = sbr.rel (%p525) target = $region60
      $region59: #{tpu_custom_call.1} parent=5 // pred_region
        %s528 = ssub.s32 %s22, 2
        // Predicated region
        $region61: #{tpu_custom_call.1} parent=59 // pred_check
          %p529 = pneg %p177
        $region62: #{tpu_custom_call.1} parent=59 // pred_check_branch
          %531 = sbr.rel (%p529) target = $region64
        $region63: #{tpu_custom_call.1} parent=59 // pred_region
          %s532 = sand.u32 %s162, 1
          %s533 = scalar_lea.sflag [#allocation4], %s532
          %s534 = sand.u32 %s162, 1
          %s535 = smul.addr %s534, 4
          %s536 = scalar_lea.vmem [#allocation10], %s535
          %538 = dma.done %s533, 64
        $region64: #{tpu_custom_call.1} parent=59 // pred_fallthru
          _
      $region60: #{tpu_custom_call.1} parent=5 // pred_fallthru
        _
    $region6: #{tpu_custom_call.1} parent=1 // loop_footer
      %s26 = sadd.s32 1, %s22
    $region7: #{tpu_custom_call.1} parent=1 // loop_footer_branch
      %21 = sbr.rel target = $region3
    $region8: #{tpu_custom_call.1} parent=1 // loop_exit
      _
    %539 = vsyncpa [#allocation3], 1
    %s540 = scalar_lea.sflag [#allocation3], 1
    %541 = vsyncpa %s540, 1
    %542 = vsyncpa [#allocation6], 1
    %s543 = scalar_lea.sflag [#allocation6], 1
    %544 = vsyncpa %s543, 1
    %545 = vsyncpa [#allocation9], 1
    %s546 = scalar_lea.sflag [#allocation9], 1
    %547 = vsyncpa %s546, 1
    %548 = vsyncpa [#allocation4], 1
    %s549 = scalar_lea.sflag [#allocation4], 1
    %550 = vsyncpa %s549, 1

</llo_original>
